<compile_context>
chip_gen: v7x
topology: tpu7x:2x2x1
jax: 0.10.0
libtpu: 0.0.40
codegen_flags: <defaults>
</compile_context>

<pallas_src>
import functools

import jax
import jax.numpy as jnp
from jax.experimental import pallas as pl
from jax.experimental.pallas import tpu as pltpu


def _round_up(v, m):
    return ((v + m - 1) // m) * m


def _vmem_capacity_bytes():
    try:
        return int(pltpu.get_tpu_info().vmem_capacity_bytes)
    except Exception:
        return 64 * 1024 * 1024  # conservative: v7x per-TC physical VMEM


def _sublane_multiple(dtype):
    # f32 -> 8, bf16 -> 16, int8/fp8 -> 32
    return max(8, 32 // jnp.dtype(dtype).itemsize)


# --------------------------- kernels ----------------------------------------


def _glu_kernel_fullk(x_ref, w_ref, b_ref, o_ref):
    # x_ref: (TM, F_pad); w_ref: (F_pad, 2*TN) = [W1 tile | W2 tile];
    # b_ref: (1, 2*TN) f32; o_ref: (TM, TN)
    tn = o_ref.shape[-1]
    h = jnp.dot(x_ref[...], w_ref[...],
                preferred_element_type=jnp.float32) + b_ref[...]
    gate = jax.nn.sigmoid(h[:, :tn])          # f32, EUP
    o_ref[...] = (gate * h[:, tn:]).astype(o_ref.dtype)


def _glu_kernel_ktiled(x_ref, w_ref, b_ref, o_ref, acc_ref):
    # Same as above but with a K (reduction) grid axis and an f32 accumulator.
    k = pl.program_id(2)

    @pl.when(k == 0)
    def _():
        acc_ref[...] = jnp.zeros_like(acc_ref)

    acc_ref[...] += jnp.dot(x_ref[...], w_ref[...],
                            preferred_element_type=jnp.float32)

    @pl.when(k == pl.num_programs(2) - 1)
    def _():
        tn = o_ref.shape[-1]
        h = acc_ref[...] + b_ref[...]
        gate = jax.nn.sigmoid(h[:, :tn])
        o_ref[...] = (gate * h[:, tn:]).astype(o_ref.dtype)


# --------------------------- tiling policy -----------------------------------


def _choose_feature_tiles(F_pad, w_itemsize, vmem_cap):
    """Pick (tn, tk).  tk == F_pad selects the full-K (no accumulator) path."""
    w_budget = int(0.40 * vmem_cap)  # budget for the double-buffered weight tile
    # Widest output tile first: fewer x re-reads, DMA better hidden under MXU.
    for tn in (512, 256, 128):
        if F_pad % tn:
            continue
        if 2 * F_pad * (2 * tn) * w_itemsize <= w_budget:
            return tn, F_pad  # full-K fits VMEM
    # K-tiled path: moderate output width, shrink K block until it fits.
    tn = 256 if F_pad % 256 == 0 else 128
    tk = 128
    for cand in (4096, 2048, 1024, 512, 256, 128):
        if F_pad % cand == 0 and 2 * cand * (2 * tn) * w_itemsize <= w_budget:
            tk = cand
            break
    return tn, tk


# --------------------------- wrapper ------------------------------------------


def make_glu(w1, b1, w2, b2, *, compute_dtype=None, interpret=False):
    """Build a GLU forward fn: x -> sigmoid(x @ w1.T + b1) * (x @ w2.T + b2).

    w1, w2: (F, F) torch (out_features, in_features) layout; b1, b2: (F,).
    The weight repack (transpose, pad, W1/W2 interleave) happens exactly once
    here; the returned callable only runs the Pallas kernel.
    """
    F = int(w1.shape[0])
    assert w1.shape == (F, F) and w2.shape == (F, F)
    assert b1.shape == (F,) and b2.shape == (F,)

    w_dtype = jnp.dtype(compute_dtype) if compute_dtype is not None \
        else jnp.dtype(jnp.result_type(w1))
    w_itemsize = w_dtype.itemsize

    F_pad = _round_up(F, 128)
    vmem_cap = _vmem_capacity_bytes()
    tn, tk = _choose_feature_tiles(F_pad, w_itemsize, vmem_cap)
    n_j = F_pad // tn
    n_k = F_pad // tk
    ktiled = n_k > 1

    # ---- one-time weight / bias repack (plain XLA ops, executed eagerly) ----
    def prep_w(w):
        wt = jnp.pad(jnp.asarray(w, w_dtype).T, ((0, F_pad - F), (0, F_pad - F)))
        return wt.reshape(F_pad, n_j, tn)

    def prep_b(b):
        return jnp.pad(jnp.asarray(b, jnp.float32), (0, F_pad - F)).reshape(1, n_j, tn)

    # Interleave so columns [j*2*tn:(j+1)*2*tn] = [W1 tile j | W2 tile j].
    w_cat = jnp.stack([prep_w(w1), prep_w(w2)], axis=2).reshape(F_pad, 2 * F_pad)
    b_cat = jnp.stack([prep_b(b1), prep_b(b2)], axis=2).reshape(1, 2 * F_pad)
    w_cat = jax.block_until_ready(w_cat)
    b_cat = jax.block_until_ready(b_cat)

    @jax.jit
    def _apply(x, w_cat, b_cat):
        B = x.shape[0]
        x_itemsize = jnp.dtype(x.dtype).itemsize
        out_itemsize = x_itemsize
        sub = _sublane_multiple(x.dtype)

        # Batch tile: up to 256 for big batches (amortize per-step overhead),
        # gated so the double-buffered x tile stays within ~20% of VMEM.
        tm = min(256 if B >= 256 else 128, _round_up(B, sub))
        while tm > sub and 2 * tm * tk * x_itemsize > int(0.20 * vmem_cap):
            tm //= 2
        tm = max(sub, _round_up(tm, sub))
        B_pad = _round_up(B, tm)
        n_i = B_pad // tm

        x_pad = x
        aligned = (B_pad == B) and (F_pad == F)
        if not aligned:
            x_pad = jnp.pad(x, ((0, B_pad - B), (0, F_pad - F)))

        per_step = (2 * tm * tk * x_itemsize            # x tile (double-buffered)
                    + 2 * tk * (2 * tn) * w_itemsize    # fused weight tile
                    + 2 * (2 * tn) * 4                  # f32 bias
                    + 2 * tm * tn * out_itemsize        # output tile
                    + (tm * 2 * tn * 4 if ktiled else 0))  # f32 accumulator
        vmem_limit = min(int(0.90 * vmem_cap),
                         max(32 * 1024 * 1024, int(1.5 * per_step)))

        cost = pl.CostEstimate(
            flops=2 * B_pad * F_pad * (2 * F_pad),
            transcendentals=B_pad * F_pad,
            bytes_accessed=(n_j * B_pad * F_pad * x_itemsize   # x re-read per j
                            + F_pad * 2 * F_pad * w_itemsize   # fused weights (once)
                            + 2 * F_pad * 4                    # f32 bias
                            + B_pad * F_pad * out_itemsize),   # output
        )

        if ktiled:
            grid = (n_j, n_i, n_k)
            in_specs = [
                pl.BlockSpec((tm, tk), lambda j, i, k: (i, k)),         # x
                pl.BlockSpec((tk, 2 * tn), lambda j, i, k: (k, j)),     # fused W
                pl.BlockSpec((1, 2 * tn), lambda j, i, k: (0, j)),      # fused b
            ]
            out_spec = pl.BlockSpec((tm, tn), lambda j, i, k: (i, j))
            scratch = [pltpu.VMEM((tm, 2 * tn), jnp.float32)]
            kernel = _glu_kernel_ktiled
            # Shard megacore on the feature axis j (weight traffic dominates);
            # reduction axis k stays last and "arbitrary".
            dims = ("parallel", "arbitrary", "arbitrary")
        else:
            grid = (n_j, n_i)
            in_specs = [
                pl.BlockSpec((tm, F_pad), lambda j, i: (i, 0)),         # x
                pl.BlockSpec((F_pad, 2 * tn), lambda j, i: (0, j)),     # fused W
                pl.BlockSpec((1, 2 * tn), lambda j, i: (0, j)),         # fused b
            ]
            out_spec = pl.BlockSpec((tm, tn), lambda j, i: (i, j))
            scratch = []
            kernel = _glu_kernel_fullk
            dims = ("parallel", "arbitrary")

        out_pad = pl.pallas_call(
            kernel,
            out_shape=jax.ShapeDtypeStruct((B_pad, F_pad), x.dtype),
            grid_spec=pltpu.PrefetchScalarGridSpec(
                num_scalar_prefetch=0,
                grid=grid,
                in_specs=in_specs,
                out_specs=out_spec,
                scratch_shapes=scratch,
            ),
            compiler_params=pltpu.CompilerParams(
                dimension_semantics=dims,
                vmem_limit_bytes=vmem_limit,
            ),
            cost_estimate=cost,
            interpret=interpret,
        )(x_pad, w_cat, b_cat)

        if not aligned:
            return out_pad[:B, :F]
        return out_pad

    return functools.partial(_apply, w_cat=w_cat, b_cat=b_cat)


def glu_reference(x, w1, b1, w2, b2):
    return jax.nn.sigmoid(x @ w1.T + b1) * (x @ w2.T + b2)


if __name__ == "__main__":
    key = jax.random.PRNGKey(0)
    k_x, k_w1, k_b1, k_w2, k_b2 = jax.random.split(key, 5)

    batch, input_size = 8, 32  # small shapes consistent with the module
    x = jax.random.normal(k_x, (batch, input_size), dtype=jnp.float32)
    bound = 1.0 / (input_size ** 0.5)
    w1 = jax.random.uniform(k_w1, (input_size, input_size), minval=-bound,
                            maxval=bound, dtype=jnp.float32)
    b1 = jax.random.uniform(k_b1, (input_size,), minval=-bound, maxval=bound,
                            dtype=jnp.float32)
    w2 = jax.random.uniform(k_w2, (input_size, input_size), minval=-bound,
                            maxval=bound, dtype=jnp.float32)
    b2 = jax.random.uniform(k_b2, (input_size,), minval=-bound, maxval=bound,
                            dtype=jnp.float32)

    glu = make_glu(w1, b1, w2, b2)   # one-time weight repack happens here
    out = glu(x)
    out = jax.block_until_ready(out)
    out2 = jax.block_until_ready(glu(x))   # cached-prep path: no repack

    ref = glu_reference(x, w1, b1, w2, b2)
    assert out.shape == (batch, input_size)
    assert jnp.allclose(out, ref, atol=1e-5, rtol=1e-5), "mismatch vs reference"
    assert jnp.allclose(out2, ref, atol=1e-5, rtol=1e-5), "mismatch vs reference"

    print("KERNEL_OK")
</pallas_src>

<mosaic_0001>
module attributes {stable_mosaic.version = 11 : i64} {
  func.func @_glu_kernel_fullk(%arg0: i32, %arg1: i32, %arg2: memref<8x128xf32, #tpu.memory_space<vmem>>, %arg3: memref<128x256xf32, #tpu.memory_space<vmem>>, %arg4: memref<1x256xf32, #tpu.memory_space<vmem>>, %arg5: memref<8x128xf32, #tpu.memory_space<vmem>>) attributes {dimension_semantics = [#tpu.dimension_semantics<parallel>, #tpu.dimension_semantics<arbitrary>], iteration_bounds = array<i64: 1, 1>, scalar_prefetch = 0 : i64, scratch_operands = 0 : i64, tpu.core_type = #tpu.core_type<tc>, window_params = [{transform_indices = @transform_0, window_bounds = array<i64: 8, 128>}, {transform_indices = @transform_1, window_bounds = array<i64: 128, 256>}, {transform_indices = @transform_2, window_bounds = array<i64: 1, 256>}, {transform_indices = @transform_3, window_bounds = array<i64: 8, 128>}]} {
    %c0 = arith.constant 0 : index
    %c0_0 = arith.constant 0 : index
    %0 = vector.load %arg2[%c0, %c0_0] : memref<8x128xf32, #tpu.memory_space<vmem>>, vector<8x128xf32>
    %c0_1 = arith.constant 0 : index
    %c0_2 = arith.constant 0 : index
    %1 = vector.load %arg3[%c0_1, %c0_2] : memref<128x256xf32, #tpu.memory_space<vmem>>, vector<128x256xf32>
    %cst = arith.constant dense<0.000000e+00> : vector<8x256xf32>
    %2 = tpu.matmul %0, %1, %cst {dimension_numbers = #tpu.dot_dimension_numbers<[1], [0], [0], [1], [0, 0, 1, 1], [], []>} : vector<8x128xf32>, vector<128x256xf32>, vector<8x256xf32> -> vector<8x256xf32>
    %c0_3 = arith.constant 0 : index
    %c0_4 = arith.constant 0 : index
    %3 = vector.load %arg4[%c0_3, %c0_4] : memref<1x256xf32, #tpu.memory_space<vmem>>, vector<1x256xf32>
    %4 = vector.broadcast %3 : vector<1x256xf32> to vector<8x256xf32>
    %5 = arith.addf %2, %4 : vector<8x256xf32>
    %6 = vector.extract_strided_slice %5 {offsets = [0, 0], sizes = [8, 128], strides = [1, 1]} : vector<8x256xf32> to vector<8x128xf32>
    %7 = arith.negf %6 : vector<8x128xf32>
    %8 = math.exp %7 : vector<8x128xf32>
    %cst_5 = arith.constant 1.000000e+00 : f32
    %9 = vector.broadcast %cst_5 : f32 to vector<8x128xf32>
    %10 = arith.addf %9, %8 : vector<8x128xf32>
    %11 = arith.divf %9, %10 : vector<8x128xf32>
    %12 = vector.extract_strided_slice %5 {offsets = [0, 128], sizes = [8, 128], strides = [1, 1]} : vector<8x256xf32> to vector<8x128xf32>
    %13 = arith.mulf %11, %12 : vector<8x128xf32>
    %c0_6 = arith.constant 0 : index
    %c0_7 = arith.constant 0 : index
    %14 = vector.load %arg5[%c0_6, %c0_7] : memref<8x128xf32, #tpu.memory_space<vmem>>, vector<8x128xf32>
    tpu.vector_store %arg5[%c0_6, %c0_7], %13 {strides = array<i32>} : memref<8x128xf32, #tpu.memory_space<vmem>>, vector<8x128xf32>,
    return
  }
  func.func @transform_0(%arg0: i32, %arg1: i32) -> (i32, i32) {
    %c0_i32 = arith.constant 0 : i32
    %c0_i32_0 = arith.constant 0 : i32
    return %arg1, %c0_i32 : i32, i32
  }
  func.func @transform_1(%arg0: i32, %arg1: i32) -> (i32, i32) {
    %c0_i32 = arith.constant 0 : i32
    %c0_i32_0 = arith.constant 0 : i32
    return %c0_i32, %arg0 : i32, i32
  }
  func.func @transform_2(%arg0: i32, %arg1: i32) -> (i32, i32) {
    %c0_i32 = arith.constant 0 : i32
    %c0_i32_0 = arith.constant 0 : i32
    return %c0_i32, %arg0 : i32, i32
  }
  func.func @transform_3(%arg0: i32, %arg1: i32) -> (i32, i32) {
    %c0_i32 = arith.constant 0 : i32
    return %arg1, %arg0 : i32, i32
  }
}

</mosaic_0001>

<llo_original>
// kernel: _apply.1
$region0: #{_apply.1}
  #allocation0 [shape = 'u32[]', space=smem, size = 0x4, offset = 0x4, fixed_abs, tag = 'smem constant byte address 0x4 - core index']
  #allocation1 [shape = 'u32[144,128]{1,0:T(1,128)}', space=vmem, size = 0x12000, scoped, tag = 'internal scratch']
  %s0 = inlined_call_operand.vmem [shape: f32[8,128], index: 0, kind: input, shape index: {}]
  %s1 = inlined_call_operand.hbm [shape: f32[128,256], index: 1, kind: input, shape index: {}]
  %s2 = inlined_call_operand.vmem [shape: f32[1,256], index: 2, kind: input, shape index: {}]
  %s3 = inlined_call_operand.hbm [shape: f32[8,128], index: 3, kind: output, shape index: {}]
  %s4 = sld [smem:[#allocation0]]
  $region26: #{_apply.1} parent=0
    _
  %s6 = ssub.s32 1, %s4
  %s7 = scalar_select 0, %s6, %s4
  $region1: #{_apply.1} parent=0
    #allocation2 [shape = 'u8[131072]{0}', space=vmem, size = 0x20000, scoped, tag = 'input window, operand 1, single buffered']
    #allocation3 [shape = 's32[1]{0}', space=sflag, size = 0x4, scoped, tag = 'scoped memory for _apply.1']
    #allocation4 [shape = 's32[1]{0}', space=sflag, size = 0x4, scoped, tag = 'scoped memory for _apply.1']
    #allocation5 [shape = 'u8[4096]{0}', space=vmem, size = 0x1000, scoped, tag = 'output window, operand 0, single buffered']
    %8 = vsyncpa [#allocation3], 0
    %9 = vsyncpa [#allocation4], 0
    // Predicated region
    $region2: #{_apply.1} parent=1 // pred_check
      _
    $region3: #{_apply.1} parent=1 // pred_check_branch
      %11 = sbr.rel (0) target = $region5
    $region4: #{_apply.1} parent=1 // pred_region
      _
    $region5: #{_apply.1} parent=1 // pred_fallthru
      _
    // Predicated region
    $region6: #{_apply.1} parent=1 // pred_check
      _
    $region7: #{_apply.1} parent=1 // pred_check_branch
      %13 = sbr.rel (0) target = $region9
    $region8: #{_apply.1} parent=1 // pred_region
      %s15 = ssub.s32 4096, 4096
      %16 = vsyncadd [#allocation3], %s15
      %s17 = sshll.u32 [#allocation2], 4
      %s18 = int_to_ptr.vmem [resolvable:$true] %s17
      %23 = dma.hbm_to_vmem [thread:$0]  %s1, 4096, %s18, [#allocation3], 256, 256, 16
    $region9: #{_apply.1} parent=1 // pred_fallthru
      _
    // Predicated region
    $region10: #{_apply.1} parent=1 // pred_check
      _
    $region11: #{_apply.1} parent=1 // pred_check_branch
      %25 = sbr.rel (0) target = $region13
    $region12: #{_apply.1} parent=1 // pred_region
      _
    $region13: #{_apply.1} parent=1 // pred_fallthru
      _
    // Predicated region
    $region14: #{_apply.1} parent=1 // pred_check
      _
    $region15: #{_apply.1} parent=1 // pred_check_branch
      %27 = sbr.rel (0) target = $region17
    $region16: #{_apply.1} parent=1 // pred_region
      %28 = dma.done [#allocation3], 4096
    $region17: #{_apply.1} parent=1 // pred_fallthru
      _
    %v29 = vld [vmem:[%s0] sm:$0xff]
    %v30 = vld [vmem:[#allocation2] sm:$0xff]
    %v31 = vld [vmem:[#allocation2 + $0x8] sm:$0xff]
    %v32 = vld [vmem:[#allocation2 + $0x10] sm:$0xff]
    %v33 = vld [vmem:[#allocation2 + $0x18] sm:$0xff]
    %v34 = vld [vmem:[#allocation2 + $0x20] sm:$0xff]
    %v35 = vld [vmem:[#allocation2 + $0x28] sm:$0xff]
    %v36 = vld [vmem:[#allocation2 + $0x30] sm:$0xff]
    %v37 = vld [vmem:[#allocation2 + $0x38] sm:$0xff]
    %v38 = vld [vmem:[#allocation2 + $0x40] sm:$0xff]
    %v39 = vld [vmem:[#allocation2 + $0x48] sm:$0xff]
    %v40 = vld [vmem:[#allocation2 + $0x50] sm:$0xff]
    %v41 = vld [vmem:[#allocation2 + $0x58] sm:$0xff]
    %v42 = vld [vmem:[#allocation2 + $0x60] sm:$0xff]
    %v43 = vld [vmem:[#allocation2 + $0x68] sm:$0xff]
    %v44 = vld [vmem:[#allocation2 + $0x70] sm:$0xff]
    %v45 = vld [vmem:[#allocation2 + $0x78] sm:$0xff]
    %v46 = vld [vmem:[#allocation2 + $0x80] sm:$0xff]
    %v47 = vld [vmem:[#allocation2 + $0x88] sm:$0xff]
    %v48 = vld [vmem:[#allocation2 + $0x90] sm:$0xff]
    %v49 = vld [vmem:[#allocation2 + $0x98] sm:$0xff]
    %v50 = vld [vmem:[#allocation2 + $0xa0] sm:$0xff]
    %v51 = vld [vmem:[#allocation2 + $0xa8] sm:$0xff]
    %v52 = vld [vmem:[#allocation2 + $0xb0] sm:$0xff]
    %v53 = vld [vmem:[#allocation2 + $0xb8] sm:$0xff]
    %v54 = vld [vmem:[#allocation2 + $0xc0] sm:$0xff]
    %v55 = vld [vmem:[#allocation2 + $0xc8] sm:$0xff]
    %v56 = vld [vmem:[#allocation2 + $0xd0] sm:$0xff]
    %v57 = vld [vmem:[#allocation2 + $0xd8] sm:$0xff]
    %v58 = vld [vmem:[#allocation2 + $0xe0] sm:$0xff]
    %v59 = vld [vmem:[#allocation2 + $0xe8] sm:$0xff]
    %v60 = vld [vmem:[#allocation2 + $0xf0] sm:$0xff]
    %v61 = vld [vmem:[#allocation2 + $0xf8] sm:$0xff]
    %v62 = vld [vmem:[%s2] sm:$0x3]
    %v64 = vlaneseq
    %v65 = vshrl.u32 %v64, 7
    %v66 = vsub.s32 0, %v65
    %v67 = vrot.slane %v62, %v66
    %v68 = vlaneseq
    %v69 = vshrl.u32 %v68, 7
    %v70 = vsub.s32 1, %v69
    %v71 = vrot.slane %v62, %v70
    %74 = vmatprep.subr.mxu0 %v31
    %75 = vmatpush1.msra.mxu0 %v30
    %76 = vmatprep.subr.mxu0 %v33
    %77 = vmatpush1.msra.mxu0 %v32
    %78 = vmatprep.subr.mxu0 %v35
    %79 = vmatpush1.msra.mxu0 %v34
    %80 = vmatprep.subr.mxu0 %v37
    %81 = vmatpush1.msra.mxu0 %v36
    %82 = vmatprep.subr.mxu0 %v39
    %83 = vmatpush1.msra.mxu0 %v38
    %84 = vmatprep.subr.mxu0 %v41
    %85 = vmatpush1.msra.mxu0 %v40
    %86 = vmatprep.subr.mxu0 %v43
    %87 = vmatpush1.msra.mxu0 %v42
    %88 = vmatprep.subr.mxu0 %v45
    %89 = vmatpush1.msra.mxu0 %v44
    %90 = vmatprep.subr.mxu0 %v47
    %91 = vmatpush1.msra.mxu0 %v46
    %92 = vmatprep.subr.mxu0 %v49
    %93 = vmatpush1.msra.mxu0 %v48
    %94 = vmatprep.subr.mxu0 %v51
    %95 = vmatpush1.msra.mxu0 %v50
    %96 = vmatprep.subr.mxu0 %v53
    %97 = vmatpush1.msra.mxu0 %v52
    %98 = vmatprep.subr.mxu0 %v55
    %99 = vmatpush1.msra.mxu0 %v54
    %100 = vmatprep.subr.mxu0 %v57
    %101 = vmatpush1.msra.mxu0 %v56
    %102 = vmatprep.subr.mxu0 %v59
    %103 = vmatpush1.msra.mxu0 %v58
    %104 = vmatprep.subr.mxu0 %v61
    %105 = vmatpush1.msra.mxu0 %v60
    %106 = vmatprep.subr.mxu0 0.0
    %107 = vmatpush1.msra.mxu0 0.0
    %108 = vmatprep.subr.mxu0 0.0
    %109 = vmatpush1.msra.mxu0 0.0
    %110 = vmatprep.subr.mxu0 0.0
    %111 = vmatpush1.msra.mxu0 0.0
    %112 = vmatprep.subr.mxu0 0.0
    %113 = vmatpush1.msra.mxu0 0.0
    %114 = vmatprep.subr.mxu0 0.0
    %115 = vmatpush1.msra.mxu0 0.0
    %116 = vmatprep.subr.mxu0 0.0
    %117 = vmatpush1.msra.mxu0 0.0
    %118 = vmatprep.subr.mxu0 0.0
    %119 = vmatpush1.msra.mxu0 0.0
    %120 = vmatprep.subr.mxu0 0.0
    %121 = vmatpush1.msra.mxu0 0.0
    %122 = vmatprep.subr.mxu0 0.0
    %123 = vmatpush1.msra.mxu0 0.0
    %124 = vmatprep.subr.mxu0 0.0
    %125 = vmatpush1.msra.mxu0 0.0
    %126 = vmatprep.subr.mxu0 0.0
    %127 = vmatpush1.msra.mxu0 0.0
    %128 = vmatprep.subr.mxu0 0.0
    %129 = vmatpush1.msra.mxu0 0.0
    %130 = vmatprep.subr.mxu0 0.0
    %131 = vmatpush1.msra.mxu0 0.0
    %132 = vmatprep.subr.mxu0 0.0
    %133 = vmatpush1.msra.mxu0 0.0
    %134 = vmatprep.subr.mxu0 0.0
    %135 = vmatpush1.msra.mxu0 0.0
    %136 = vmatprep.subr.mxu0 0.0
    %137 = vmatpush1.msra.mxu0 0.0
    %138 = vmatprep.mubr.f32.mxu0 0.0
    %139 = vmatmul.mubr.f32.gmra.mrb[0].mxu0 %v29
    %v140 = vpop.f32.mrb[0].mxu0
    %v141 = vadd.f32 %v67, %v140
    %v142 = vpop.f32.mrb[0].mxu0
    %v143 = vadd.f32 %v71, %v142
    %144 = vdwg.mxu0
    %v145 = vxor.u32 %v141, 2147483648
    %v146 = vmul.f32 %v145, 1.442695
    %v147 = vpow.pop %v146
    %v148 = vadd.f32 %v147, 1.0
    %v149 = vrcp.pop %v148
    %v150 = vmul.f32 1.0, %v149
    %v151 = vmul.f32 %v150, %v143
    %152 = vst [vmem:[#allocation5] sm:$0xff] %v151
    // Predicated region
    $region18: #{_apply.1} parent=1 // pred_check
      _
    $region19: #{_apply.1} parent=1 // pred_check_branch
      %154 = sbr.rel (0) target = $region21
    $region20: #{_apply.1} parent=1 // pred_region
      %s156 = ssub.s32 128, 128
      %157 = vsyncadd [#allocation4], %s156
      %s159 = sshll.u32 [#allocation5], 4
      %s160 = int_to_ptr.vmem [resolvable:$true] %s159
      %162 = dma.vmem_to_hbm [thread:$0]  %s160, 128, %s3, [#allocation4]
    $region21: #{_apply.1} parent=1 // pred_fallthru
      _
    // Predicated region
    $region22: #{_apply.1} parent=1 // pred_check
      _
    $region23: #{_apply.1} parent=1 // pred_check_branch
      %164 = sbr.rel (0) target = $region25
    $region24: #{_apply.1} parent=1 // pred_region
      %165 = dma.done [#allocation4], 128
    $region25: #{_apply.1} parent=1 // pred_fallthru
      _
    %166 = vsyncpa [#allocation3], 1
    %167 = vsyncpa [#allocation4], 1

</llo_original>
